<compile_context>
chip_gen: v5e
topology: v5e:2x2
jax: 0.10.0
libtpu: 0.0.40
codegen_flags: <defaults>
</compile_context>

<pallas_src>
import functools

import jax
import jax.numpy as jnp
from jax.experimental import pallas as pl
from jax.experimental.pallas import tpu as pltpu


def _round_up(x, m):
    return ((x + m - 1) // m) * m


def _cdiv(a, b):
    return (a + b - 1) // b


# ---------------------------------------------------------------------------
# Fused Pallas kernel: conv banks + global max-pool + bias/ReLU + dense head
# ---------------------------------------------------------------------------

def fused_cnn_kernel(emb_ref, w_ref, cb_ref, th_ref, dw_ref, db_ref,
                     fw_ref, fb_ref, o_ref, *, SUB, num_sub, n_int, K_max):
    # emb_ref : (B_T, L_pad, E) bf16  full (padded) sequence for this batch tile
    # w_ref   : (K_max*E, nKFp) bf16  tap-stacked fused conv weights
    # cb_ref  : (1, nKFp) f32         fused conv bias (pad columns = 0)
    # th_ref  : (1, nKFp) i32         last valid position per column (L_q-1-bank)
    # dw_ref  : (nKFp, F) f32         dense weight (rows for pad columns = 0)
    # db_ref  : (1, F) f32
    # fw_ref  : (F, C) f32, fb_ref: (1, C) f32
    # o_ref   : (1, B_T, C) f32       sigmoid output for this batch tile
    B_T, L_pad, E = emb_ref.shape
    nKFp = w_ref.shape[1]
    NEG = jnp.float32(-jnp.inf)

    w = w_ref[...]                                     # (K_max*E, nKFp) bf16
    thr = th_ref[...]                                  # (1, nKFp) i32

    def conv_chunk(off):
        # Stack the K shifted taps along the lane (contraction) axis and do
        # ONE MXU matmul with contraction depth K_max*E.
        taps = [emb_ref[:, pl.ds(off + k, SUB), :].reshape(B_T * SUB, E)
                for k in range(K_max)]
        lhs = taps[0] if K_max == 1 else jnp.concatenate(taps, axis=-1)
        y = jnp.dot(lhs, w, preferred_element_type=jnp.float32)
        return y.reshape(B_T, SUB, nKFp)               # f32

    acc = jnp.full((B_T, nKFp), NEG, jnp.float32)      # running global max

    # Interior sub-chunks: every position valid for every bank -> no masking.
    if n_int > 0:
        def body(c, acc):
            off = pl.multiple_of(c * SUB, 8)
            y = conv_chunk(off)
            return jnp.maximum(acc, jnp.max(y, axis=1))
        acc = jax.lax.fori_loop(0, n_int, body, acc)

    # Boundary sub-chunks (at most 2): mask each bank's tail and the padded
    # sequence tail (padded ids embed a real vocab row) to -inf before max.
    for c in range(n_int, num_sub):
        off = c * SUB
        y = conv_chunk(off)
        pos = off + jax.lax.broadcasted_iota(jnp.int32, (SUB, 1), 0)
        valid = pos <= thr                             # (SUB, nKFp)
        y = jnp.where(valid[None], y, NEG)
        acc = jnp.maximum(acc, jnp.max(y, axis=1))

    # Tiny fused head:  relu(pool + conv_b) -> relu(dense) -> fc -> sigmoid.
    # max_t relu(y_t + b) == relu(max_t y_t + b)  (bias const over t, ReLU mono)
    h = jnp.maximum(acc + cb_ref[...], 0.0)
    z = jnp.dot(h, dw_ref[...], preferred_element_type=jnp.float32) + db_ref[...]
    z = jnp.maximum(z, 0.0)
    logits = jnp.dot(z, fw_ref[...], preferred_element_type=jnp.float32) + fb_ref[...]
    o_ref[...] = (1.0 / (1.0 + jnp.exp(-logits)))[None]


# ---------------------------------------------------------------------------
# Parameters
# ---------------------------------------------------------------------------

class Args:
    h = 32            # filters
    kernels = 3       # Ks = [1, 2, 3]
    batch_norm = False
    dropout = 0.0
    train_embed = False


def init_params(key, n_words, emb_dim, args, C=3):
    """PyTorch-layout parameters (Conv1d weight = (F, E, K), etc.)."""
    Ks = list(range(1, args.kernels + 1))
    keys = jax.random.split(key, 4 + 2 * len(Ks))
    params = {
        'embedding': jax.random.normal(keys[0], (n_words, emb_dim), jnp.float32) * 0.1,
        'conv_w': [], 'conv_b': [],
    }
    for i, K in enumerate(Ks):
        params['conv_w'].append(
            jax.random.normal(keys[1 + 2 * i], (args.h, emb_dim, K), jnp.float32) * 0.1)
        params['conv_b'].append(
            jax.random.normal(keys[2 + 2 * i], (args.h,), jnp.float32) * 0.1)
    kd, kf = keys[-2], keys[-1]
    params['dense_w'] = jax.random.normal(kd, (len(Ks) * args.h, args.h), jnp.float32) * 0.1
    params['dense_b'] = jnp.zeros((args.h,), jnp.float32)
    params['fc_w'] = jax.random.normal(kf, (args.h, C), jnp.float32) * 0.1
    params['fc_b'] = jnp.zeros((C,), jnp.float32)
    return params


def prepare_params(params, args, C=3):
    """One-time weight columnization / fusion / padding / casting."""
    Ks = list(range(1, args.kernels + 1))
    K_max = Ks[-1]
    F = args.h
    E = params['embedding'].shape[1]
    nKF = len(Ks) * F
    nKFp = _round_up(nKF, 128)        # full-lane output width (96 -> 128)

    # w_fused[k*E + e, b*F + f] = conv_w[b][f, e, k]  (zero for k >= K_b / pad)
    w_fused = jnp.zeros((K_max, E, nKFp), jnp.float32)
    conv_b = jnp.zeros((nKFp,), jnp.float32)
    for b, K in enumerate(Ks):
        w = params['conv_w'][b]                        # (F, E, K) PyTorch layout
        for k in range(K):
            w_fused = w_fused.at[k, :, b * F:(b + 1) * F].set(w[:, :, k].T)
        conv_b = conv_b.at[b * F:(b + 1) * F].set(params['conv_b'][b])

    # Per-column bank id (kernel size = bank + 1).  Pad columns get a hugely
    # negative bank so they are never -inf-masked (their weights are zero, so
    # they only ever contribute exact zeros and zero dense rows kill them).
    bank = jnp.full((nKFp,), -(1 << 20), jnp.int32)
    bank = bank.at[:nKF].set(jnp.arange(nKF, dtype=jnp.int32) // F)

    dense_w = jnp.zeros((nKFp, F), jnp.float32).at[:nKF].set(
        params['dense_w'].astype(jnp.float32))

    return {
        'embedding': params['embedding'].astype(jnp.bfloat16),
        'w_fused': w_fused.reshape(K_max * E, nKFp).astype(jnp.bfloat16),
        'conv_b': conv_b.reshape(1, nKFp),
        'bank': bank.reshape(1, nKFp),
        'dense_w': dense_w,
        'dense_b': params['dense_b'].reshape(1, F).astype(jnp.float32),
        'fc_w': params['fc_w'].astype(jnp.float32),
        'fc_b': params['fc_b'].reshape(1, C).astype(jnp.float32),
    }


# ---------------------------------------------------------------------------
# Forward pass
# ---------------------------------------------------------------------------

def cnn_dense_forward(prep, x_ids, args, *, b_tile=8, sub=512):
    F = args.h
    K_max = args.kernels
    HALO = K_max - 1
    C = prep['fc_w'].shape[1]
    E = prep['embedding'].shape[1]
    nKFp = prep['w_fused'].shape[1]

    x_ids = x_ids[:, :3000]                            # x[:, :3000]
    B, L_q = x_ids.shape

    # Compute-granularity sub-chunking inside the kernel (DMA block is the
    # whole sequence; the f32 conv temp never exceeds (B_T, SUB, nKFp)).
    SUB = max(8, min(_round_up(sub, 8), _round_up(L_q, 8)))
    num_sub = _cdiv(L_q, SUB)                          # chunks covering [0, L_q)
    n_int = min(num_sub, max(0, (L_q - HALO) // SUB))  # mask-free chunks
    L_pad = _round_up(num_sub * SUB + HALO, 8)

    # Batch tiling: expose >= 2 grid tiles whenever B >= 2 (v7x megacore).
    if B >= 2 * b_tile:
        B_TILE = b_tile
    else:
        B_TILE = max(1, (B + 1) // 2)
    num_b = _cdiv(B, B_TILE)
    B_pad = num_b * B_TILE

    # Pad the cheap int32 ids (not the embedded tensor); padded tail positions
    # embed a real vocab row but are -inf-masked per bank inside the kernel.
    ids = jnp.pad(x_ids, ((0, B_pad - B), (0, L_pad - L_q)))
    emb = jnp.take(prep['embedding'], ids, axis=0)     # (B_pad, L_pad, E) bf16

    # Last valid conv position per output column: L_q - 1 - bank.
    thresh = (jnp.int32(L_q - 1) - prep['bank']).astype(jnp.int32)

    kernel = functools.partial(fused_cnn_kernel, SUB=SUB, num_sub=num_sub,
                               n_int=n_int, K_max=K_max)

    out = pl.pallas_call(
        kernel,
        out_shape=jax.ShapeDtypeStruct((num_b, B_TILE, C), jnp.float32),
        grid=(num_b,),
        in_specs=[
            pl.BlockSpec((B_TILE, L_pad, E), lambda bi: (bi, 0, 0)),
            pl.BlockSpec((K_max * E, nKFp), lambda bi: (0, 0)),
            pl.BlockSpec((1, nKFp), lambda bi: (0, 0)),
            pl.BlockSpec((1, nKFp), lambda bi: (0, 0)),
            pl.BlockSpec((nKFp, F), lambda bi: (0, 0)),
            pl.BlockSpec((1, F), lambda bi: (0, 0)),
            pl.BlockSpec((F, C), lambda bi: (0, 0)),
            pl.BlockSpec((1, C), lambda bi: (0, 0)),
        ],
        out_specs=pl.BlockSpec((1, B_TILE, C), lambda bi: (bi, 0, 0)),
        compiler_params=pltpu.CompilerParams(
            dimension_semantics=("parallel",)),
    )(emb, prep['w_fused'], prep['conv_b'], thresh, prep['dense_w'],
      prep['dense_b'], prep['fc_w'], prep['fc_b'])

    return out.reshape(B_pad, C)[:B]


# ---------------------------------------------------------------------------
# Pure-JAX reference (same bf16-rounded conv inputs, f32 math)
# ---------------------------------------------------------------------------

def reference_forward(prep, x_ids, args):
    F = args.h
    K_max = args.kernels
    nKF = K_max * F
    x_ids = x_ids[:, :3000]
    emb = jnp.take(prep['embedding'].astype(jnp.float32), x_ids, axis=0)
    B, L_q, E = emb.shape
    w = prep['w_fused'].astype(jnp.float32).reshape(K_max, E, -1)
    feats = []
    for b in range(K_max):
        K = b + 1
        L_out = L_q - K + 1
        y = jnp.zeros((B, L_out, F), jnp.float32)
        for k in range(K):
            y = y + jnp.einsum('ble,ef->blf', emb[:, k:k + L_out, :],
                               w[k, :, b * F:(b + 1) * F])
        y = jnp.maximum(y + prep['conv_b'][0, b * F:(b + 1) * F], 0.0)
        feats.append(jnp.max(y, axis=1))
    h = jnp.concatenate(feats, axis=1)                 # (B, nKF)
    z = jnp.maximum(h @ prep['dense_w'][:nKF] + prep['dense_b'], 0.0)
    logits = z @ prep['fc_w'] + prep['fc_b']
    return jax.nn.sigmoid(logits)


# ---------------------------------------------------------------------------

if __name__ == "__main__":
    args = Args()
    key = jax.random.PRNGKey(0)
    k_param, k_data = jax.random.split(key)

    n_words, emb_dim = 50, 16
    B, L = 2, 40
    params = init_params(k_param, n_words, emb_dim, args)
    prep = prepare_params(params, args)
    x_ids = jax.random.randint(k_data, (B, L), 0, n_words, dtype=jnp.int32)

    ref = reference_forward(prep, x_ids, args)

    # 1) default path: single (boundary) sub-chunk covers the whole sequence
    out = cnn_dense_forward(prep, x_ids, args)
    jax.block_until_ready(out)
    assert out.shape == (B, 3)
    err = float(jnp.max(jnp.abs(out - ref)))
    assert err < 2e-2, f"mismatch vs reference (default path): {err}"

    # 2) forced sub-chunking: exercises the mask-free interior fori_loop plus
    #    the masked boundary sub-chunk
    out2 = cnn_dense_forward(prep, x_ids, args, sub=16)
    jax.block_until_ready(out2)
    err2 = float(jnp.max(jnp.abs(out2 - ref)))
    assert err2 < 2e-2, f"mismatch vs reference (sub-chunked path): {err2}"

    print("KERNEL_OK")
</pallas_src>

<mosaic_0001>
module attributes {stable_mosaic.version = 11 : i64} {
  func.func @fused_cnn_kernel(%arg0: i32, %arg1: memref<1x48x16xbf16, #tpu.memory_space<vmem>>, %arg2: memref<48x128xbf16, #tpu.memory_space<vmem>>, %arg3: memref<1x128xf32, #tpu.memory_space<vmem>>, %arg4: memref<1x128xi32, #tpu.memory_space<vmem>>, %arg5: memref<128x32xf32, #tpu.memory_space<vmem>>, %arg6: memref<1x32xf32, #tpu.memory_space<vmem>>, %arg7: memref<32x3xf32, #tpu.memory_space<vmem>>, %arg8: memref<1x3xf32, #tpu.memory_space<vmem>>, %arg9: memref<1x1x3xf32, #tpu.memory_space<vmem>>) attributes {dimension_semantics = [#tpu.dimension_semantics<parallel>], iteration_bounds = array<i64: 2>, scalar_prefetch = 0 : i64, scratch_operands = 0 : i64, tpu.core_type = #tpu.core_type<tc>, window_params = [{transform_indices = @transform_0, window_bounds = array<i64: 1, 48, 16>}, {pipeline_mode = #tpu.pipeline_mode<synchronous>, transform_indices = @transform_1, window_bounds = array<i64: 48, 128>}, {pipeline_mode = #tpu.pipeline_mode<synchronous>, transform_indices = @transform_2, window_bounds = array<i64: 1, 128>}, {pipeline_mode = #tpu.pipeline_mode<synchronous>, transform_indices = @transform_3, window_bounds = array<i64: 1, 128>}, {pipeline_mode = #tpu.pipeline_mode<synchronous>, transform_indices = @transform_4, window_bounds = array<i64: 128, 32>}, {pipeline_mode = #tpu.pipeline_mode<synchronous>, transform_indices = @transform_5, window_bounds = array<i64: 1, 32>}, {pipeline_mode = #tpu.pipeline_mode<synchronous>, transform_indices = @transform_6, window_bounds = array<i64: 32, 3>}, {pipeline_mode = #tpu.pipeline_mode<synchronous>, transform_indices = @transform_7, window_bounds = array<i64: 1, 3>}, {transform_indices = @transform_8, window_bounds = array<i64: 1, 1, 3>}]} {
    %c0 = arith.constant 0 : index
    %c0_0 = arith.constant 0 : index
    %0 = vector.load %arg2[%c0, %c0_0] : memref<48x128xbf16, #tpu.memory_space<vmem>>, vector<48x128xbf16>
    %c0_1 = arith.constant 0 : index
    %c0_2 = arith.constant 0 : index
    %1 = vector.load %arg4[%c0_1, %c0_2] : memref<1x128xi32, #tpu.memory_space<vmem>>, vector<1x128xi32>
    %cst = arith.constant 0xFF800000 : f32
    %2 = vector.broadcast %cst : f32 to vector<1x128xf32>
    %c0_3 = arith.constant 0 : index
    %c0_4 = arith.constant 0 : index
    %c0_5 = arith.constant 0 : index
    %3 = vector.load %arg1[%c0_3, %c0_4, %c0_5] : memref<1x48x16xbf16, #tpu.memory_space<vmem>>, vector<1x40x16xbf16>
    %4 = vector.shape_cast %3 : vector<1x40x16xbf16> to vector<40x16xbf16>
    %c0_6 = arith.constant 0 : index
    %c1 = arith.constant 1 : index
    %c0_7 = arith.constant 0 : index
    %5 = vector.load %arg1[%c0_6, %c1, %c0_7] : memref<1x48x16xbf16, #tpu.memory_space<vmem>>, vector<1x40x16xbf16>
    %6 = vector.shape_cast %5 : vector<1x40x16xbf16> to vector<40x16xbf16>
    %c0_8 = arith.constant 0 : index
    %c2 = arith.constant 2 : index
    %c0_9 = arith.constant 0 : index
    %7 = vector.load %arg1[%c0_8, %c2, %c0_9] : memref<1x48x16xbf16, #tpu.memory_space<vmem>>, vector<1x40x16xbf16>
    %8 = vector.shape_cast %7 : vector<1x40x16xbf16> to vector<40x16xbf16>
    %9 = tpu.concatenate %4, %6, %8 in 1 : vector<40x16xbf16>, vector<40x16xbf16>, vector<40x16xbf16> -> vector<40x48xbf16>
    %cst_10 = arith.constant dense<0.000000e+00> : vector<40x128xf32>
    %10 = tpu.matmul %9, %0, %cst_10 {dimension_numbers = #tpu.dot_dimension_numbers<[1], [0], [0], [1], [0, 0, 1, 1], [], []>} : vector<40x48xbf16>, vector<48x128xbf16>, vector<40x128xf32> -> vector<40x128xf32>
    %11 = vector.shape_cast %10 : vector<40x128xf32> to vector<1x40x128xf32>
    %12 = tpu.iota {dimensions = array<i32: 0>} : vector<40x1xi32>
    %c0_i32 = arith.constant 0 : i32
    %13 = vector.broadcast %c0_i32 : i32 to vector<40x1xi32>
    %14 = arith.addi %13, %12 : vector<40x1xi32>
    %15 = vector.broadcast %14 : vector<40x1xi32> to vector<40x128xi32>
    %16 = vector.broadcast %1 : vector<1x128xi32> to vector<40x128xi32>
    %17 = arith.cmpi sle, %15, %16 : vector<40x128xi32>
    %18 = vector.shape_cast %17 : vector<40x128xi1> to vector<1x40x128xi1>
    %cst_11 = arith.constant 0xFF800000 : f32
    %19 = vector.broadcast %cst_11 : f32 to vector<1x40x128xf32>
    %20 = arith.select %18, %11, %19 : vector<1x40x128xi1>, vector<1x40x128xf32>
    %cst_12 = arith.constant dense<0xFF800000> : vector<1x128xf32>
    %21 = vector.multi_reduction <maximumf>, %20, %cst_12 [1] : vector<1x40x128xf32> to vector<1x128xf32>
    %22 = arith.maximumf %2, %21 : vector<1x128xf32>
    %c0_13 = arith.constant 0 : index
    %c0_14 = arith.constant 0 : index
    %23 = vector.load %arg3[%c0_13, %c0_14] : memref<1x128xf32, #tpu.memory_space<vmem>>, vector<1x128xf32>
    %24 = arith.addf %22, %23 : vector<1x128xf32>
    %cst_15 = arith.constant 0.000000e+00 : f32
    %25 = vector.broadcast %cst_15 : f32 to vector<1x128xf32>
    %26 = arith.maximumf %24, %25 : vector<1x128xf32>
    %c0_16 = arith.constant 0 : index
    %c0_17 = arith.constant 0 : index
    %27 = vector.load %arg5[%c0_16, %c0_17] : memref<128x32xf32, #tpu.memory_space<vmem>>, vector<128x32xf32>
    %cst_18 = arith.constant dense<0.000000e+00> : vector<1x32xf32>
    %28 = tpu.matmul %26, %27, %cst_18 {dimension_numbers = #tpu.dot_dimension_numbers<[1], [0], [0], [1], [0, 0, 1, 1], [], []>} : vector<1x128xf32>, vector<128x32xf32>, vector<1x32xf32> -> vector<1x32xf32>
    %c0_19 = arith.constant 0 : index
    %c0_20 = arith.constant 0 : index
    %29 = vector.load %arg6[%c0_19, %c0_20] : memref<1x32xf32, #tpu.memory_space<vmem>>, vector<1x32xf32>
    %30 = arith.addf %28, %29 : vector<1x32xf32>
    %cst_21 = arith.constant 0.000000e+00 : f32
    %31 = vector.broadcast %cst_21 : f32 to vector<1x32xf32>
    %32 = arith.maximumf %30, %31 : vector<1x32xf32>
    %c0_22 = arith.constant 0 : index
    %c0_23 = arith.constant 0 : index
    %33 = vector.load %arg7[%c0_22, %c0_23] : memref<32x3xf32, #tpu.memory_space<vmem>>, vector<32x3xf32>
    %cst_24 = arith.constant dense<0.000000e+00> : vector<1x3xf32>
    %34 = tpu.matmul %32, %33, %cst_24 {dimension_numbers = #tpu.dot_dimension_numbers<[1], [0], [0], [1], [0, 0, 1, 1], [], []>} : vector<1x32xf32>, vector<32x3xf32>, vector<1x3xf32> -> vector<1x3xf32>
    %c0_25 = arith.constant 0 : index
    %c0_26 = arith.constant 0 : index
    %35 = vector.load %arg8[%c0_25, %c0_26] : memref<1x3xf32, #tpu.memory_space<vmem>>, vector<1x3xf32>
    %36 = arith.addf %34, %35 : vector<1x3xf32>
    %cst_27 = arith.constant 0.000000e+00 : f32
    %37 = vector.broadcast %cst_27 : f32 to vector<1x3xf32>
    %38 = arith.subf %37, %36 : vector<1x3xf32>
    %39 = math.exp %38 : vector<1x3xf32>
    %cst_28 = arith.constant 1.000000e+00 : f32
    %40 = vector.broadcast %cst_28 : f32 to vector<1x3xf32>
    %41 = arith.addf %40, %39 : vector<1x3xf32>
    %cst_29 = arith.constant 1.000000e+00 : f32
    %42 = vector.broadcast %cst_29 : f32 to vector<1x3xf32>
    %43 = arith.divf %42, %41 : vector<1x3xf32>
    %44 = vector.shape_cast %43 : vector<1x3xf32> to vector<1x1x3xf32>
    %c0_30 = arith.constant 0 : index
    %c0_31 = arith.constant 0 : index
    %c0_32 = arith.constant 0 : index
    %45 = vector.load %arg9[%c0_30, %c0_31, %c0_32] : memref<1x1x3xf32, #tpu.memory_space<vmem>>, vector<1x1x3xf32>
    tpu.vector_store %arg9[%c0_30, %c0_31, %c0_32], %44 {strides = array<i32>} : memref<1x1x3xf32, #tpu.memory_space<vmem>>, vector<1x1x3xf32>,
    return
  }
  func.func @transform_0(%arg0: i32) -> (i32, i32, i32) {
    %c0_i32 = arith.constant 0 : i32
    %c0_i32_0 = arith.constant 0 : i32
    %c0_i32_1 = arith.constant 0 : i32
    return %arg0, %c0_i32, %c0_i32_0 : i32, i32, i32
  }
  func.func @transform_1(%arg0: i32) -> (i32, i32) {
    %c0_i32 = arith.constant 0 : i32
    %c0_i32_0 = arith.constant 0 : i32
    %c0_i32_1 = arith.constant 0 : i32
    return %c0_i32, %c0_i32_0 : i32, i32
  }
  func.func @transform_2(%arg0: i32) -> (i32, i32) {
    %c0_i32 = arith.constant 0 : i32
    %c0_i32_0 = arith.constant 0 : i32
    %c0_i32_1 = arith.constant 0 : i32
    return %c0_i32, %c0_i32_0 : i32, i32
  }
  func.func @transform_3(%arg0: i32) -> (i32, i32) {
    %c0_i32 = arith.constant 0 : i32
    %c0_i32_0 = arith.constant 0 : i32
    %c0_i32_1 = arith.constant 0 : i32
    return %c0_i32, %c0_i32_0 : i32, i32
  }
  func.func @transform_4(%arg0: i32) -> (i32, i32) {
    %c0_i32 = arith.constant 0 : i32
    %c0_i32_0 = arith.constant 0 : i32
    %c0_i32_1 = arith.constant 0 : i32
    return %c0_i32, %c0_i32_0 : i32, i32
  }
  func.func @transform_5(%arg0: i32) -> (i32, i32) {
    %c0_i32 = arith.constant 0 : i32
    %c0_i32_0 = arith.constant 0 : i32
    %c0_i32_1 = arith.constant 0 : i32
    return %c0_i32, %c0_i32_0 : i32, i32
  }
  func.func @transform_6(%arg0: i32) -> (i32, i32) {
    %c0_i32 = arith.constant 0 : i32
    %c0_i32_0 = arith.constant 0 : i32
    %c0_i32_1 = arith.constant 0 : i32
    return %c0_i32, %c0_i32_0 : i32, i32
  }
  func.func @transform_7(%arg0: i32) -> (i32, i32) {
    %c0_i32 = arith.constant 0 : i32
    %c0_i32_0 = arith.constant 0 : i32
    %c0_i32_1 = arith.constant 0 : i32
    return %c0_i32, %c0_i32_0 : i32, i32
  }
  func.func @transform_8(%arg0: i32) -> (i32, i32, i32) {
    %c0_i32 = arith.constant 0 : i32
    %c0_i32_0 = arith.constant 0 : i32
    %c0_i32_1 = arith.constant 0 : i32
    return %arg0, %c0_i32, %c0_i32_0 : i32, i32, i32
  }
}

</mosaic_0001>

<llo_original>
// kernel: tpu_custom_call.1
$region0: #{tpu_custom_call.1}
  #allocation0 [shape = 'u32[]', space=smem, size = 0x4, offset = 0x4, fixed_abs, tag = 'smem constant byte address 0x4 - core index']
  #allocation1 [shape = 'u32[72,128]{1,0:T(1,128)}', space=vmem, size = 0x9000, scoped, tag = 'internal scratch']
  %s0 = inlined_call_operand.vmem [shape: bf16[2,48,16], index: 0, kind: input, shape index: {}]
  %s1 = inlined_call_operand.vmem [shape: bf16[48,128], index: 1, kind: input, shape index: {}]
  %s2 = inlined_call_operand.vmem [shape: f32[1,128], index: 2, kind: input, shape index: {}]
  %s3 = inlined_call_operand.vmem [shape: s32[1,128], index: 3, kind: input, shape index: {}]
  %s4 = inlined_call_operand.vmem [shape: f32[128,32], index: 4, kind: input, shape index: {}]
  %s5 = inlined_call_operand.vmem [shape: f32[1,32], index: 5, kind: input, shape index: {}]
  %s6 = inlined_call_operand.vmem [shape: f32[32,3], index: 6, kind: input, shape index: {}]
  %s7 = inlined_call_operand.vmem [shape: f32[1,3], index: 7, kind: input, shape index: {}]
  %s8 = inlined_call_operand.hbm [shape: f32[2,1,3], index: 8, kind: output, shape index: {}]
  %s9 = sld [smem:[#allocation0]]
  $region65: #{tpu_custom_call.1} parent=0
    _
  %s11 = ssub.s32 1, %s9
  %s12 = scalar_select 0, %s11, %s9
  $region1: #{tpu_custom_call.1} parent=0
    #allocation2 [shape = 'u8[1024]{0}', space=vmem, size = 0x400, scoped, tag = 'output window, operand 0']
    #allocation3 [shape = 's32[2]{0}', space=sflag, size = 0x8, scoped, tag = 'scoped memory for tpu_custom_call.1']
    %13 = vsyncpa [#allocation3], 0
    %s14 = scalar_lea.sflag [#allocation3], 1
    %15 = vsyncpa %s14, 0
    loop: start=0, step=1, limit=4
    $region2: #{tpu_custom_call.1} parent=1 // loop_pre_header
      _
    $region3: #{tpu_custom_call.1} parent=1 // loop_header
      %s17 = sphi 0, %s21
      %p18 = scmp.ge.s32.totalorder %s17, 4
      %s27 = sphi 0, %s29
      %s30 = sphi 0, %s27
      %s31 = sphi 0, %s30
      %s47 = sphi 0, %s31
      %s51 = sphi 0, %s51
      %s53 = sphi 0, %s51
      %s54 = sphi 0, %s53
      %s68 = sphi 0, %s54
      %s72 = sphi 0, %s72
      %s74 = sphi 0, %s72
      %s75 = sphi 0, %s74
      %s89 = sphi 0, %s75
      %s93 = sphi 0, %s93
      %s95 = sphi 0, %s93
      %s96 = sphi 0, %s95
      %s110 = sphi 0, %s96
      %s114 = sphi 0, %s114
      %s116 = sphi 0, %s114
      %s117 = sphi 0, %s116
      %s131 = sphi 0, %s117
      %s135 = sphi 0, %s135
      %s137 = sphi 0, %s135
      %s138 = sphi 0, %s137
      %s152 = sphi 0, %s138
      %s156 = sphi 0, %s156
      %s158 = sphi 0, %s156
      %s159 = sphi 0, %s158
      %s173 = sphi 0, %s159
      %s177 = sphi 0, %s177
      %s179 = sphi 0, %s177
      %s180 = sphi 0, %s179
      %s194 = sphi 0, %s180
      %s200 = sphi 0, %s202
      %s203 = sphi 0, %s200
      %s204 = sphi 0, %s203
      %s220 = sphi 0, %s204
    $region4: #{tpu_custom_call.1} parent=1 // loop_header_branch
      %20 = sbr.rel (%p18) target = $region8
    $region5: #{tpu_custom_call.1} parent=1 // loop_body
      %s22 = ssub.s32 %s17, 1
      %s23 = ssub.s32 %s17, 2
      %s24 = sadd.s32 %s17, 1
      %s25 = ssub.s32 %s17, %s24
      %p26 = scmp.eq.s32.totalorder %s25, 0
      %s28 = sadd.s32 %s27, 1
      %s29 = scalar_select %p26, %s27, %s28
      %p32 = pneg %p26
      %p33 = scmp.eq.s32.totalorder %s17, 1
      %p34 = por %p32, %p33
      %p35 = scmp.ne.s32.totalorder %s27, %s30
      %p36 = scmp.eq.s32.totalorder %s17, 0
      %p37 = por %p35, %p36
      %p38 = scmp.ne.s32.totalorder %s27, %s30
      %p39 = scmp.eq.s32.totalorder %s22, 1
      %p40 = por %p38, %p39
      %p41 = scmp.ne.s32.totalorder %s30, %s31
      %p42 = scmp.eq.s32.totalorder %s22, 0
      %p43 = por %p41, %p42
      %p44 = scmp.ne.s32.totalorder %s30, %s31
      %p45 = scmp.eq.s32.totalorder %s23, 1
      %p46 = por %p44, %p45
      %p48 = scmp.ne.s32.totalorder %s31, %s47
      %p49 = scmp.eq.s32.totalorder %s23, 0
      %p50 = por %p48, %p49
      %s52 = sadd.s32 %s51, 1
      %p55 = scmp.eq.s32.totalorder %s17, 1
      %p56 = scmp.ne.s32.totalorder %s51, %s53
      %p57 = scmp.eq.s32.totalorder %s17, 0
      %p58 = por %p56, %p57
      %p59 = scmp.ne.s32.totalorder %s51, %s53
      %p60 = scmp.eq.s32.totalorder %s22, 1
      %p61 = por %p59, %p60
      %p62 = scmp.ne.s32.totalorder %s53, %s54
      %p63 = scmp.eq.s32.totalorder %s22, 0
      %p64 = por %p62, %p63
      %p65 = scmp.ne.s32.totalorder %s53, %s54
      %p66 = scmp.eq.s32.totalorder %s23, 1
      %p67 = por %p65, %p66
      %p69 = scmp.ne.s32.totalorder %s54, %s68
      %p70 = scmp.eq.s32.totalorder %s23, 0
      %p71 = por %p69, %p70
      %s73 = sadd.s32 %s72, 1
      %p76 = scmp.eq.s32.totalorder %s17, 1
      %p77 = scmp.ne.s32.totalorder %s72, %s74
      %p78 = scmp.eq.s32.totalorder %s17, 0
      %p79 = por %p77, %p78
      %p80 = scmp.ne.s32.totalorder %s72, %s74
      %p81 = scmp.eq.s32.totalorder %s22, 1
      %p82 = por %p80, %p81
      %p83 = scmp.ne.s32.totalorder %s74, %s75
      %p84 = scmp.eq.s32.totalorder %s22, 0
      %p85 = por %p83, %p84
      %p86 = scmp.ne.s32.totalorder %s74, %s75
      %p87 = scmp.eq.s32.totalorder %s23, 1
      %p88 = por %p86, %p87
      %p90 = scmp.ne.s32.totalorder %s75, %s89
      %p91 = scmp.eq.s32.totalorder %s23, 0
      %p92 = por %p90, %p91
      %s94 = sadd.s32 %s93, 1
      %p97 = scmp.eq.s32.totalorder %s17, 1
      %p98 = scmp.ne.s32.totalorder %s93, %s95
      %p99 = scmp.eq.s32.totalorder %s17, 0
      %p100 = por %p98, %p99
      %p101 = scmp.ne.s32.totalorder %s93, %s95
      %p102 = scmp.eq.s32.totalorder %s22, 1
      %p103 = por %p101, %p102
      %p104 = scmp.ne.s32.totalorder %s95, %s96
      %p105 = scmp.eq.s32.totalorder %s22, 0
      %p106 = por %p104, %p105
      %p107 = scmp.ne.s32.totalorder %s95, %s96
      %p108 = scmp.eq.s32.totalorder %s23, 1
      %p109 = por %p107, %p108
      %p111 = scmp.ne.s32.totalorder %s96, %s110
      %p112 = scmp.eq.s32.totalorder %s23, 0
      %p113 = por %p111, %p112
      %s115 = sadd.s32 %s114, 1
      %p118 = scmp.eq.s32.totalorder %s17, 1
      %p119 = scmp.ne.s32.totalorder %s114, %s116
      %p120 = scmp.eq.s32.totalorder %s17, 0
      %p121 = por %p119, %p120
      %p122 = scmp.ne.s32.totalorder %s114, %s116
      %p123 = scmp.eq.s32.totalorder %s22, 1
      %p124 = por %p122, %p123
      %p125 = scmp.ne.s32.totalorder %s116, %s117
      %p126 = scmp.eq.s32.totalorder %s22, 0
      %p127 = por %p125, %p126
      %p128 = scmp.ne.s32.totalorder %s116, %s117
      %p129 = scmp.eq.s32.totalorder %s23, 1
      %p130 = por %p128, %p129
      %p132 = scmp.ne.s32.totalorder %s117, %s131
      %p133 = scmp.eq.s32.totalorder %s23, 0
      %p134 = por %p132, %p133
      %s136 = sadd.s32 %s135, 1
      %p139 = scmp.eq.s32.totalorder %s17, 1
      %p140 = scmp.ne.s32.totalorder %s135, %s137
      %p141 = scmp.eq.s32.totalorder %s17, 0
      %p142 = por %p140, %p141
      %p143 = scmp.ne.s32.totalorder %s135, %s137
      %p144 = scmp.eq.s32.totalorder %s22, 1
      %p145 = por %p143, %p144
      %p146 = scmp.ne.s32.totalorder %s137, %s138
      %p147 = scmp.eq.s32.totalorder %s22, 0
      %p148 = por %p146, %p147
      %p149 = scmp.ne.s32.totalorder %s137, %s138
      %p150 = scmp.eq.s32.totalorder %s23, 1
      %p151 = por %p149, %p150
      %p153 = scmp.ne.s32.totalorder %s138, %s152
      %p154 = scmp.eq.s32.totalorder %s23, 0
      %p155 = por %p153, %p154
      %s157 = sadd.s32 %s156, 1
      %p160 = scmp.eq.s32.totalorder %s17, 1
      %p161 = scmp.ne.s32.totalorder %s156, %s158
      %p162 = scmp.eq.s32.totalorder %s17, 0
      %p163 = por %p161, %p162
      %p164 = scmp.ne.s32.totalorder %s156, %s158
      %p165 = scmp.eq.s32.totalorder %s22, 1
      %p166 = por %p164, %p165
      %p167 = scmp.ne.s32.totalorder %s158, %s159
      %p168 = scmp.eq.s32.totalorder %s22, 0
      %p169 = por %p167, %p168
      %p170 = scmp.ne.s32.totalorder %s158, %s159
      %p171 = scmp.eq.s32.totalorder %s23, 1
      %p172 = por %p170, %p171
      %p174 = scmp.ne.s32.totalorder %s159, %s173
      %p175 = scmp.eq.s32.totalorder %s23, 0
      %p176 = por %p174, %p175
      %s178 = sadd.s32 %s177, 1
      %p181 = scmp.eq.s32.totalorder %s17, 1
      %p182 = scmp.ne.s32.totalorder %s177, %s179
      %p183 = scmp.eq.s32.totalorder %s17, 0
      %p184 = por %p182, %p183
      %p185 = scmp.ne.s32.totalorder %s177, %s179
      %p186 = scmp.eq.s32.totalorder %s22, 1
      %p187 = por %p185, %p186
      %p188 = scmp.ne.s32.totalorder %s179, %s180
      %p189 = scmp.eq.s32.totalorder %s22, 0
      %p190 = por %p188, %p189
      %p191 = scmp.ne.s32.totalorder %s179, %s180
      %p192 = scmp.eq.s32.totalorder %s23, 1
      %p193 = por %p191, %p192
      %p195 = scmp.ne.s32.totalorder %s180, %s194
      %p196 = scmp.eq.s32.totalorder %s23, 0
      %p197 = por %p195, %p196
      %s198 = ssub.s32 %s17, %s24
      %p199 = scmp.eq.s32.totalorder %s198, 0
      %s201 = sadd.s32 %s200, 1
      %s202 = scalar_select %p199, %s200, %s201
      %p205 = pneg %p199
      %p206 = scmp.eq.s32.totalorder %s17, 1
      %p207 = por %p205, %p206
      %p208 = scmp.ne.s32.totalorder %s200, %s203
      %p209 = scmp.eq.s32.totalorder %s17, 0
      %p210 = por %p208, %p209
      %p211 = scmp.ne.s32.totalorder %s200, %s203
      %p212 = scmp.eq.s32.totalorder %s22, 1
      %p213 = por %p211, %p212
      %p214 = scmp.ne.s32.totalorder %s203, %s204
      %p215 = scmp.eq.s32.totalorder %s22, 0
      %p216 = por %p214, %p215
      %p217 = scmp.ne.s32.totalorder %s203, %s204
      %p218 = scmp.eq.s32.totalorder %s23, 1
      %p219 = por %p217, %p218
      %p221 = scmp.ne.s32.totalorder %s204, %s220
      %p222 = scmp.eq.s32.totalorder %s23, 0
      %p223 = por %p221, %p222
      %p224 = scmp.le.s32.totalorder 1, %s17
      %p225 = scmp.lt.s32.totalorder %s17, 3
      %p226 = pnand %p224, %p225
      %p227 = pneg %p226
      // Predicated region
      $region9: #{tpu_custom_call.1} parent=5 // pred_check
        _
      $region10: #{tpu_custom_call.1} parent=5 // pred_check_branch
        %229 = sbr.rel (%p226) target = $region12
      $region11: #{tpu_custom_call.1} parent=5 // pred_region
        %s230 = ssub.s32 %s17, 1
        // Predicated region
        $region13: #{tpu_custom_call.1} parent=11 // pred_check
          %p231 = pneg %p64
        $region14: #{tpu_custom_call.1} parent=11 // pred_check_branch
          %233 = sbr.rel (%p231) target = $region16
        $region15: #{tpu_custom_call.1} parent=11 // pred_region
          _
        $region16: #{tpu_custom_call.1} parent=11 // pred_fallthru
          _
        // Predicated region
        $region17: #{tpu_custom_call.1} parent=11 // pred_check
          %p234 = pneg %p85
        $region18: #{tpu_custom_call.1} parent=11 // pred_check_branch
          %236 = sbr.rel (%p234) target = $region20
        $region19: #{tpu_custom_call.1} parent=11 // pred_region
          _
        $region20: #{tpu_custom_call.1} parent=11 // pred_fallthru
          _
        // Predicated region
        $region21: #{tpu_custom_call.1} parent=11 // pred_check
          %p237 = pneg %p106
        $region22: #{tpu_custom_call.1} parent=11 // pred_check_branch
          %239 = sbr.rel (%p237) target = $region24
        $region23: #{tpu_custom_call.1} parent=11 // pred_region
          _
        $region24: #{tpu_custom_call.1} parent=11 // pred_fallthru
          _
        // Predicated region
        $region25: #{tpu_custom_call.1} parent=11 // pred_check
          %p240 = pneg %p127
        $region26: #{tpu_custom_call.1} parent=11 // pred_check_branch
          %242 = sbr.rel (%p240) target = $region28
        $region27: #{tpu_custom_call.1} parent=11 // pred_region
          _
        $region28: #{tpu_custom_call.1} parent=11 // pred_fallthru
          _
        // Predicated region
        $region29: #{tpu_custom_call.1} parent=11 // pred_check
          %p243 = pneg %p148
        $region30: #{tpu_custom_call.1} parent=11 // pred_check_branch
          %245 = sbr.rel (%p243) target = $region32
        $region31: #{tpu_custom_call.1} parent=11 // pred_region
          _
        $region32: #{tpu_custom_call.1} parent=11 // pred_fallthru
          _
        // Predicated region
        $region33: #{tpu_custom_call.1} parent=11 // pred_check
          %p246 = pneg %p169
        $region34: #{tpu_custom_call.1} parent=11 // pred_check_branch
          %248 = sbr.rel (%p246) target = $region36
        $region35: #{tpu_custom_call.1} parent=11 // pred_region
          _
        $region36: #{tpu_custom_call.1} parent=11 // pred_fallthru
          _
        // Predicated region
        $region37: #{tpu_custom_call.1} parent=11 // pred_check
          %p249 = pneg %p190
        $region38: #{tpu_custom_call.1} parent=11 // pred_check_branch
          %251 = sbr.rel (%p249) target = $region40
        $region39: #{tpu_custom_call.1} parent=11 // pred_region
          _
        $region40: #{tpu_custom_call.1} parent=11 // pred_fallthru
          _
      $region12: #{tpu_custom_call.1} parent=5 // pred_fallthru
        _
      %p252 = scmp.lt.s32.totalorder %s17, 2
      // Predicated region
      $region41: #{tpu_custom_call.1} parent=5 // pred_check
        %p253 = pneg %p252
      $region42: #{tpu_custom_call.1} parent=5 // pred_check_branch
        %255 = sbr.rel (%p253) target = $region44
      $region43: #{tpu_custom_call.1} parent=5 // pred_region
        // Predicated region
        $region45: #{tpu_custom_call.1} parent=43 // pred_check
          %p256 = pneg %p37
        $region46: #{tpu_custom_call.1} parent=43 // pred_check_branch
          %258 = sbr.rel (%p256) target = $region48
        $region47: #{tpu_custom_call.1} parent=43 // pred_region
          %p259 = scmp.lt.s32.totalorder %s17, 1
          %s260 = scalar_select %p259, %s17, 1
          %s261 = smul.addr %s260, 6
          %s262 = smul.addr %s261, 4
          %s263 = scalar_lea.vmem %s0, %s262
        $region48: #{tpu_custom_call.1} parent=43 // pred_fallthru
          _
      $region44: #{tpu_custom_call.1} parent=5 // pred_fallthru
        _
      %p264 = scmp.le.s32.totalorder 1, %s17
      %p265 = scmp.lt.s32.totalorder %s17, 3
      %p266 = pnand %p264, %p265
      %p267 = pneg %p266
      // Predicated region
      $region49: #{tpu_custom_call.1} parent=5 // pred_check
        _
      $region50: #{tpu_custom_call.1} parent=5 // pred_check_branch
        %269 = sbr.rel (%p266) target = $region52
      $region51: #{tpu_custom_call.1} parent=5 // pred_region
        %s270 = ssub.s32 %s17, 1
        %p271 = scmp.lt.s32.totalorder %s22, 1
        %s272 = scalar_select %p271, %s22, 1
        %s273 = smul.addr %s272, 6
        %s274 = smul.addr %s273, 4
        %s275 = scalar_lea.vmem %s0, %s274
        %p276 = pneg %p43
        %p277 = pneg %p40
        %p278 = pneg %p64
        %p279 = pneg %p61
        %p280 = pneg %p85
        %p281 = pneg %p82
        %p282 = pneg %p106
        %p283 = pneg %p103
        %p284 = pneg %p127
        %p285 = pneg %p124
        %p286 = pneg %p148
        %p287 = pneg %p145
        %p288 = pneg %p169
        %p289 = pneg %p166
        %p290 = pneg %p190
        %p291 = pneg %p187
        %p292 = pneg %p216
        %p293 = pneg %p213
        %s294 = sand.u32 %s203, 1
        %s295 = scalar_lea.sflag [#allocation3], %s294
        %s296 = sand.u32 %s203, 1
        %s297 = scalar_lea.vmem [#allocation2], %s296
        %p298 = scmp.lt.s32.totalorder %s22, 1
        %s299 = scalar_select %p298, %s22, 1
        %s300 = smul.addr %s299, 6
        %s301 = smul.addr %s300, 4
        %s302 = scalar_lea.vmem %s0, %s301
        %v304 = vld [vmem:[%s1] sm:$0xf]
        %v305 = vld [vmem:[%s1 + $0x4] sm:$0xf]
        %v306 = vld [vmem:[%s1 + $0x8] sm:$0xf]
        %v307 = vld [vmem:[%s1 + $0xc] sm:$0xf]
        %v308 = vld [vmem:[%s1 + $0x10] sm:$0xf]
        %v309 = vld [vmem:[%s1 + $0x14] sm:$0xf]
        %v310 = vld [vmem:[%s3] sm:$0x1]
        %v311 = vld [vmem:[%s302] sm:$0xf]
        %v312 = vld [vmem:[%s302 + $0x4] sm:$0xf]
        %v313 = vld [vmem:[%s302 + $0x8] sm:$0xf]
        %v314 = vld [vmem:[%s302 + $0xc] sm:$0xf]
        %v315 = vld [vmem:[%s302 + $0x10] sm:$0xf]
        %v316 = vld [vmem:[%s302 + $0x14] sm:$0x1]
        %v317 = vld [vmem:[%s302] sm:$0xe]
        %v323 = vunpack.c.l.b16 %v311
        %v324 = vunpack.c.l.b16 %v312
        %v325 = vunpack.c.l.b16 %v313
        %v326 = vunpack.c.l.b16 %v314
        %v327 = vunpack.c.l.b16 %v315
        %v328 = vpack.c.b16 %v324, %v323
        %v329 = vpack.c.b16 %v326, %v325
        %v330 = vpack.c.b16 %v327, %v327
        %v332 = vunpack.c.l.b16 %v316
        %v333 = vpack.c.b16 %v332, %v327
        %vm334 = vsmask.f32 7424
        %v336 = vshrl.u32 %v328, 16
        %v338 = vshll.u32 %v328, 16
        %v340 = vrot.slane %v338, 1
        %v341 = vor.u32 %v336, %v340
        %v343 = vshll.u32 %v329, 16
        %v345 = vrot.slane %v343, 1
        %v346 = vsel %vm334, %v341, %v345
        %v347 = vshrl.u32 %v329, 16
        %v349 = vor.u32 %v347, %v345
        %v351 = vshll.u32 %v333, 16
        %v353 = vrot.slane %v351, 1
        %v354 = vsel %vm334, %v349, %v353
        %v355 = vshrl.u32 %v333, 16
        %v357 = vor.u32 %v355, %v353
        %358 = vrot.lane.b32.xlu0 %v346, 16
        %v359 = vpop.permute.xlu0 %358
        %360 = vrot.lane.b32.xlu0 %v354, 16
        %v361 = vpop.permute.xlu0 %360
        %362 = vrot.lane.b32.xlu0 %v357, 16
        %v363 = vpop.permute.xlu0 %362
        %v365 = vunpack.c.l.b16 %v317
        %v366 = vpack.c.b16 %v324, %v365
        %vm367 = vcmask 1046528
        %v368 = vrot.slane %v366, 1
        %v369 = vrot.slane %v329, 1
        %v370 = vsel %vm367, %v368, %v369
        %v371 = vrot.slane %v333, 1
        %v372 = vsel %vm367, %v369, %v371
        %373 = vrot.lane.b32.xlu0 %v370, 32
        %v374 = vpop.permute.xlu0 %373
        %375 = vrot.lane.b32.xlu0 %v372, 32
        %v376 = vpop.permute.xlu0 %375
        %377 = vrot.lane.b32.xlu0 %v371, 32
        %v378 = vpop.permute.xlu0 %377
        %vm379 = vcmask 130048
        %v381 = vsel %vm379, %v328, %v359
        %v383 = vsel %vm379, %v329, %v361
        %v386 = vsel %vm379, %v330, %v363
        %vm387 = vcmask 261120
        %v389 = vsel %vm387, %v381, %v374
        %v391 = vsel %vm387, %v383, %v376
        %v393 = vsel %vm387, %v386, %v378
        %v400 = vunpack.c.l.b16 %v304
        %v401 = vunpack.c.l.b16 %v305
        %v402 = vunpack.c.l.b16 %v306
        %v403 = vunpack.c.l.b16 %v307
        %v404 = vunpack.c.l.b16 %v308
        %v405 = vunpack.c.l.b16 %v309
        %v406 = vpack.c.b16 %v401, %v400
        %v407 = vpack.c.b16 %v403, %v402
        %v408 = vpack.c.b16 %v405, %v404
        %vm412 = vcmask 392192
        %v413 = vsel %vm412, %v389, 0
        %v415 = vsel %vm412, %v391, 0
        %v417 = vsel %vm412, %v393, 0
        %419 = vmatpush.bf16.msra.mxu0 0
        %420 = vmatpush.bf16.msra.mxu0 0
        %421 = vmatpush.bf16.msra.mxu0 0
        %422 = vmatpush.bf16.msra.mxu0 0
        %423 = vmatpush.bf16.msra.mxu0 0
        %424 = vmatpush.bf16.msra.mxu0 %v408
        %425 = vmatpush.bf16.msra.mxu0 %v407
        %426 = vmatpush.bf16.msra.mxu0 %v406
        %427 = vmatmul.bf16.gmra.mxu0 %v413
        %v428 = vpop.f32.mrf.mxu0
        %v429 = vadd.f32 0.0, %v428
        %v430 = vpop.f32.mrf.mxu0
        %v431 = vadd.f32 0.0, %v430
        %432 = vmatmul.bf16.gmra.mxu0 %v415
        %v433 = vpop.f32.mrf.mxu0
        %v434 = vadd.f32 0.0, %v433
        %v435 = vpop.f32.mrf.mxu0
        %v436 = vadd.f32 0.0, %v435
        %437 = vmatmul.bf16.gmra.mxu0 %v417
        %v438 = vpop.f32.mrf.mxu0
        %v439 = vadd.f32 0.0, %v438
        %v440 = vpop.f32.mrf.mxu0
        %441 = vdwg.mxu0
        %v442 = vlaneseq
        %v443 = vshrl.u32 %v442, 7
        %v444 = vadd.s32 %v443, 8
        %v445 = vadd.s32 %v443, 16
        %v446 = vadd.s32 %v443, 24
        %v447 = vadd.s32 %v443, 32
        %v448 = vperm.slane %v310, 0
        %vm449 = vcmp.le.s32.totalorder %v443, %v448
        %vm450 = vcmp.le.s32.totalorder %v444, %v448
        %vm451 = vcmp.le.s32.totalorder %v445, %v448
        %vm452 = vcmp.le.s32.totalorder %v446, %v448
        %vm453 = vcmp.le.s32.totalorder %v447, %v448
        %v454 = vsel %vm449, %v429, -inf
        %v455 = vsel %vm450, %v431, -inf
        %v456 = vsel %vm451, %v434, -inf
        %v457 = vsel %vm452, %v436, -inf
        %v458 = vsel %vm453, %v439, -inf
        %v459 = vmax.f32 %v454, %v458
        %v460 = vmax.f32 %v459, %v455
        %v461 = vmax.f32 %v456, %v457
        %v462 = vmax.f32 %v460, %v461
        %v463 = vrot.slane %v462, 4
        %v464 = vmax.f32 %v462, %v463
        %v465 = vrot.slane %v464, 2
        %v466 = vmax.f32 %v464, %v465
        %v467 = vrot.slane %v466, 1
        %v468 = vmax.f32 %v466, %v467
        %v469 = vld [vmem:[%s2] sm:$0x1]
        %v470 = vadd.f32 %v468, %v469
        %v471 = vmax.f32 %v470, 0.0
        %v472 = vld [vmem:[%s4] sm:$0xff]
        %v473 = vld [vmem:[%s4 + $0x8] sm:$0xff]
        %v474 = vld [vmem:[%s4 + $0x10] sm:$0xff]
        %v475 = vld [vmem:[%s4 + $0x18] sm:$0xff]
        %v476 = vld [vmem:[%s4 + $0x20] sm:$0xff]
        %v477 = vld [vmem:[%s4 + $0x28] sm:$0xff]
        %v478 = vld [vmem:[%s4 + $0x30] sm:$0xff]
        %v479 = vld [vmem:[%s4 + $0x38] sm:$0xff]
        %v480 = vld [vmem:[%s4 + $0x40] sm:$0xff]
        %v481 = vld [vmem:[%s4 + $0x48] sm:$0xff]
        %v482 = vld [vmem:[%s4 + $0x50] sm:$0xff]
        %v483 = vld [vmem:[%s4 + $0x58] sm:$0xff]
        %v484 = vld [vmem:[%s4 + $0x60] sm:$0xff]
        %v485 = vld [vmem:[%s4 + $0x68] sm:$0xff]
        %v486 = vld [vmem:[%s4 + $0x70] sm:$0xff]
        %v487 = vld [vmem:[%s4 + $0x78] sm:$0xff]
        %v488 = vld [vmem:[%s5] sm:$0x1]
        %489 = vmatpush.msra.mxu0 %v487
        %490 = vmatpush.msra.mxu0 %v486
        %491 = vmatpush.msra.mxu0 %v485
        %492 = vmatpush.msra.mxu0 %v484
        %493 = vmatpush.msra.mxu0 %v483
        %494 = vmatpush.msra.mxu0 %v482
        %495 = vmatpush.msra.mxu0 %v481
        %496 = vmatpush.msra.mxu0 %v480
        %497 = vmatpush.msra.mxu0 %v479
        %498 = vmatpush.msra.mxu0 %v478
        %499 = vmatpush.msra.mxu0 %v477
        %500 = vmatpush.msra.mxu0 %v476
        %501 = vmatpush.msra.mxu0 %v475
        %502 = vmatpush.msra.mxu0 %v474
        %503 = vmatpush.msra.mxu0 %v473
        %504 = vmatpush.msra.mxu0 %v472
        %505 = vmatmul.f32.gmra.mxu0 %v471
        %v506 = vpop.f32.mrf.mxu0
        %v507 = vadd.f32 %v488, %v506
        %508 = vdwg.mxu0
        %v509 = vmax.f32 %v507, 0.0
        %v510 = vld [vmem:[%s6] sm:$0xff]
        %v511 = vld [vmem:[%s6 + $0x8] sm:$0xff]
        %v512 = vld [vmem:[%s6 + $0x10] sm:$0xff]
        %v513 = vld [vmem:[%s6 + $0x18] sm:$0xff]
        %v514 = vld [vmem:[%s7] sm:$0x1]
        %v516 = vsel %vm387, %v509, 0
        %518 = vmatpush.msra.mxu0 0.0
        %519 = vmatpush.msra.mxu0 0.0
        %520 = vmatpush.msra.mxu0 0.0
        %521 = vmatpush.msra.mxu0 0.0
        %522 = vmatpush.msra.mxu0 0.0
        %523 = vmatpush.msra.mxu0 0.0
        %524 = vmatpush.msra.mxu0 0.0
        %525 = vmatpush.msra.mxu0 0.0
        %526 = vmatpush.msra.mxu0 0.0
        %527 = vmatpush.msra.mxu0 0.0
        %528 = vmatpush.msra.mxu0 0.0
        %529 = vmatpush.msra.mxu0 0.0
        %530 = vmatpush.msra.mxu0 %v513
        %531 = vmatpush.msra.mxu0 %v512
        %532 = vmatpush.msra.mxu0 %v511
        %533 = vmatpush.msra.mxu0 %v510
        %534 = vmatmul.f32.gmra.mxu0 %v516
        %v535 = vpop.f32.mrf.mxu0
        %v536 = vadd.f32 %v514, %v535
        %537 = vdwg.mxu0
        %v538 = vsub.f32 0.0, %v536
        %v539 = vmul.f32 %v538, 1.442695
        %v540 = vpow.pop %v539
        %v541 = vadd.f32 %v540, 1.0
        %v542 = vrcp.pop %v541
        %v543 = vmul.f32 %v541, %v542
        %v544 = vsub.f32 1.0, %v543
        %v545 = vmul.f32 %v542, %v544
        %v546 = vadd.f32 %v542, %v545
        %vm547 = vweird.f32 %v541
        %vm548 = vweird.f32 %v542
        %vm549 = vmor %vm547, %vm548
        %v550 = vsel %vm549, %v542, %v546
        %v551 = vand.u32 2147483647, %v541
        %vm552 = vcmp.eq.f32.partialorder %v551, 8.507059e+37
        %v553 = vand.u32 %v541, 2147483648
        %v554 = vor.u32 1.1754944e-38, %v553
        %v555 = vsel %vm552, %v554, %v550
        %v556 = vmul.f32 1.0, %v555
        %vm557 = vcmask 16384
        %558 = vst.msk [vmem:[%s297] sm:$0x1] %vm557, %v556
        %s559 = sand.u32 %s203, 1
        %s560 = scalar_lea.sflag [#allocation3], %s559
        %s561 = sand.u32 %s203, 1
        %s562 = scalar_lea.vmem [#allocation2], %s561
        // Predicated region
        $region53: #{tpu_custom_call.1} parent=51 // pred_check
          %p563 = pneg %p213
        $region54: #{tpu_custom_call.1} parent=51 // pred_check_branch
          %565 = sbr.rel (%p563) target = $region56
        $region55: #{tpu_custom_call.1} parent=51 // pred_region
          %567 = vsyncadd %s560, 0
          %s568 = scalar_lea.hbm %s8, %s22
          %s570 = sshll.u32 %s562, 4
          %s571 = int_to_ptr.vmem [resolvable:$true] %s570
          %s572 = sshll.u32 %s568, 4
          %s573 = int_to_ptr.hbm [resolvable:$true] %s572
          %575 = dma.vmem_to_hbm [thread:$0]  %s571, 16, %s573, %s560
        $region56: #{tpu_custom_call.1} parent=51 // pred_fallthru
          _
      $region52: #{tpu_custom_call.1} parent=5 // pred_fallthru
        _
      %p576 = scmp.le.s32.totalorder 2, %s17
      // Predicated region
      $region57: #{tpu_custom_call.1} parent=5 // pred_check
        %p577 = pneg %p576
      $region58: #{tpu_custom_call.1} parent=5 // pred_check_branch
        %579 = sbr.rel (%p577) target = $region60
      $region59: #{tpu_custom_call.1} parent=5 // pred_region
        %s580 = ssub.s32 %s17, 2
        // Predicated region
        $region61: #{tpu_custom_call.1} parent=59 // pred_check
          %p581 = pneg %p219
        $region62: #{tpu_custom_call.1} parent=59 // pred_check_branch
          %583 = sbr.rel (%p581) target = $region64
        $region63: #{tpu_custom_call.1} parent=59 // pred_region
          %s584 = sand.u32 %s204, 1
          %s585 = scalar_lea.sflag [#allocation3], %s584
          %s586 = sand.u32 %s204, 1
          %s587 = scalar_lea.vmem [#allocation2], %s586
          %589 = dma.done %s585, 16
        $region64: #{tpu_custom_call.1} parent=59 // pred_fallthru
          _
      $region60: #{tpu_custom_call.1} parent=5 // pred_fallthru
        _
    $region6: #{tpu_custom_call.1} parent=1 // loop_footer
      %s21 = sadd.s32 1, %s17
    $region7: #{tpu_custom_call.1} parent=1 // loop_footer_branch
      %16 = sbr.rel target = $region3
    $region8: #{tpu_custom_call.1} parent=1 // loop_exit
      _
    %590 = vsyncpa [#allocation3], 1
    %s591 = scalar_lea.sflag [#allocation3], 1
    %592 = vsyncpa %s591, 1

</llo_original>
